<compile_context>
chip_gen: v6e
topology: v6e:2x2x1
jax: 0.10.0
libtpu: 0.0.40
codegen_flags: <defaults>
</compile_context>

<pallas_src>
import math

import jax
import jax.numpy as jnp
from jax import lax
from jax.experimental import pallas as pl
from jax.experimental.pallas import tpu as pltpu


def _round_up(x, m):
    return (x + m - 1) // m * m


def _largest_divisor_leq(n, k):
    for c in range(min(n, k), 0, -1):
        if n % c == 0:
            return c
    return 1


# ----------------------- one-time parameter preparation --------------------

def prepare_params(w_ih, w_hh, b_ih, b_hh):
    """One-time parameter preprocessing (call once, NOT per forward step).

    - Reorders gate blocks from PyTorch (i, f, g, o) to (i, f, o, g) so the
      kernel runs one wide sigmoid over [:, :3Hp] and one tanh over [:, 3Hp:].
    - Transposes to (K, 4Hp) layout.
    - Pads hidden/gate dims to Hp = round_up(max(H, 128), 128) lanes.
    - Fuses the two biases; casts the recurrent weight to bf16.

    Returns (wih_t, whh_t, bias):
      wih_t: (I, 4Hp)  f32   -- used in the hoisted XLA input projection
      whh_t: (Hp, 4Hp) bf16  -- VMEM-resident recurrent weight in the kernel
      bias:  (4Hp,)    f32   -- fused b_ih + b_hh (zero in padded lanes)
    """
    H = w_hh.shape[-1]
    I = w_ih.shape[-1]
    Hp = _round_up(max(H, 128), 128)

    def reorder_pad_T(w, rows_pad):
        # w: (4H, K) PyTorch layout -> (rows_pad, 4Hp), gate order (i,f,o,g).
        i_b, f_b, g_b, o_b = jnp.split(w, 4, axis=0)           # each (H, K)
        out = jnp.zeros((4 * Hp, rows_pad), jnp.float32)
        for n, blk in enumerate([i_b, f_b, o_b, g_b]):
            out = out.at[n * Hp:n * Hp + H, :blk.shape[1]].set(
                blk.astype(jnp.float32))
        return out.T

    wih_t = reorder_pad_T(w_ih, I)                              # (I, 4Hp) f32
    whh_t = reorder_pad_T(w_hh, Hp).astype(jnp.bfloat16)        # (Hp, 4Hp)

    b = (b_ih + b_hh).astype(jnp.float32)
    i_b, f_b, g_b, o_b = jnp.split(b, 4)
    bias = jnp.zeros((4 * Hp,), jnp.float32)
    for n, blk in enumerate([i_b, f_b, o_b, g_b]):
        bias = bias.at[n * Hp:n * Hp + H].set(blk)
    return wih_t, whh_t, bias


# ------------------------------ Pallas kernel ------------------------------

def lstm_seq_kernel(xp_ref, h0_ref, c0_ref, whh_ref, h_seq_ref, c_fin_ref,
                    hbf_s, c_s):
    """Tc LSTM steps per (batch_tile, time_block) grid point.

    xp_ref holds the precomputed input projection x @ W_ih^T + bias for Tc
    steps (gate order i, f, o, g; padded to Hp lanes per gate). The only
    per-step MXU work is h_bf16 @ W_hh^T.
    """
    tblk = pl.program_id(1)
    Tc = xp_ref.shape[0]
    Hp = c0_ref.shape[-1]

    # Load the initial recurrent state into VMEM scratch on the first time
    # block of each batch tile.
    @pl.when(tblk == 0)
    def _():
        hbf_s[...] = h0_ref[...].astype(jnp.bfloat16)
        c_s[...] = c0_ref[...]

    def step(tl, carry):
        # gates: (tb, 4Hp) = hoisted input projection + recurrent matmul.
        gates = xp_ref[tl] + jnp.dot(hbf_s[...], whh_ref[...],
                                     preferred_element_type=jnp.float32)
        # One wide sigmoid over (i, f, o), one tanh over g.
        sig = jax.nn.sigmoid(gates[:, :3 * Hp])
        i_g = sig[:, 0 * Hp:1 * Hp]
        f_g = sig[:, 1 * Hp:2 * Hp]
        o_g = sig[:, 2 * Hp:3 * Hp]
        g_g = jnp.tanh(gates[:, 3 * Hp:])

        c_new = f_g * c_s[...] + i_g * g_g
        h_new = o_g * jnp.tanh(c_new)

        # Carry state: bf16 h (next matmul operand, no per-step cast on the
        # serial chain beyond this), f32 c.
        c_s[...] = c_new
        hbf_s[...] = h_new.astype(jnp.bfloat16)

        # Per-step output (lstm_out row tl of this time block).
        h_seq_ref[tl] = h_new
        return carry

    lax.fori_loop(0, Tc, step, 0, unroll=True)

    # Final c state: direct slab store on the last time block (final h is
    # simply the last h_seq step, taken in the wrapper).
    @pl.when(tblk == pl.num_programs(1) - 1)
    def _():
        c_fin_ref[...] = c_s[...]


# ------------------------------ host wrappers -------------------------------

@jax.jit
def lstm_seq(az_seq, h0, c0, wih_t, whh_t, bias):
    """Run T LSTM steps (time loop internalized in a single pallas_call).

    az_seq: (T, B, I)  input sequence
    h0, c0: (B, H)     initial state
    wih_t, whh_t, bias: outputs of prepare_params()

    Returns (h_seq, h_final, c_final): (T, B, H), (B, H), (B, H).
    """
    T, B, I = az_seq.shape
    H = h0.shape[-1]
    Hp = whh_t.shape[0]
    H4p = whh_t.shape[1]

    # Hoisted input projection: one big fully-parallel XLA GEMM over all T*B
    # rows (off the serial recurrence critical path), bias fused in.
    x_proj = jnp.einsum("tbi,ig->tbg", az_seq.astype(jnp.float32),
                        wih_t) + bias                        # (T, B, 4Hp) f32

    # Batch padding / tiling: multiple of 8 sublanes; >=2 batch blocks when
    # the batch is large enough so both TCs (megacore / v7x) get work.
    B_pad = max(_round_up(B, 8), 8)
    if B_pad >= 16:
        tb = min(128, _round_up(B_pad // 2, 8))
    else:
        tb = B_pad
    B_pad = _round_up(B_pad, tb)
    nb = B_pad // tb

    # Time chunking: Tc steps per grid iteration (unrolled inside kernel).
    Tc = _largest_divisor_leq(T, 8)
    nt = T // Tc

    xp = jnp.zeros((T, B_pad, H4p), jnp.float32).at[:, :B, :].set(x_proj)
    h0p = jnp.zeros((B_pad, Hp), jnp.float32).at[:B, :H].set(h0)
    c0p = jnp.zeros((B_pad, Hp), jnp.float32).at[:B, :H].set(c0)

    # VMEM budget from actual block sizes (double-buffered I/O + scratch),
    # with 2x headroom, capped to the smallest physical VMEM (v7x: 64 MiB).
    bytes_est = (
        2 * Tc * tb * H4p * 4      # x_proj block (double-buffered)
        + 2 * 2 * tb * Hp * 4      # h0, c0 blocks
        + 2 * Hp * H4p * 2         # W_hh^T (bf16, resident)
        + 2 * Tc * tb * Hp * 4     # h_seq output block
        + 2 * tb * Hp * 4          # c_final output block
        + tb * Hp * 6              # carried state scratch (bf16 + f32)
        + 2 * tb * H4p * 4         # in-flight gate intermediates headroom
    )
    vmem_limit = int(min(64 * 1024 * 1024,
                         max(2 * bytes_est, 4 * 1024 * 1024)))

    h_seq, c_fin = pl.pallas_call(
        lstm_seq_kernel,
        out_shape=(jax.ShapeDtypeStruct((T, B_pad, Hp), jnp.float32),
                   jax.ShapeDtypeStruct((B_pad, Hp), jnp.float32)),
        grid_spec=pltpu.PrefetchScalarGridSpec(
            num_scalar_prefetch=0,
            grid=(nb, nt),
            in_specs=[
                pl.BlockSpec((Tc, tb, H4p), lambda b, t: (t, b, 0)),  # x_proj
                pl.BlockSpec((tb, Hp), lambda b, t: (b, 0)),          # h0
                pl.BlockSpec((tb, Hp), lambda b, t: (b, 0)),          # c0
                pl.BlockSpec((Hp, H4p), lambda b, t: (0, 0)),         # W_hh^T (resident)
            ],
            out_specs=[
                pl.BlockSpec((Tc, tb, Hp), lambda b, t: (t, b, 0)),   # h per chunk
                pl.BlockSpec((tb, Hp), lambda b, t: (b, 0)),          # final c
            ],
            scratch_shapes=[pltpu.VMEM((tb, Hp), jnp.bfloat16),       # h carry (bf16)
                            pltpu.VMEM((tb, Hp), jnp.float32)],       # c carry (f32)
        ),
        compiler_params=pltpu.CompilerParams(
            dimension_semantics=("parallel", "arbitrary"),
            vmem_limit_bytes=vmem_limit,
        ),
    )(xp, h0p, c0p, whh_t)

    h_seq = h_seq[:, :B, :H]
    h_final = h_seq[T - 1]
    c_final = c_fin[:B, :H]
    return h_seq, h_final, c_final


def lstm_step(az, h_prev, c_prev, wih_t, whh_t, bias):
    """Pallas-backed equivalent of LSTM.forward(az) (single time step).

    az:      (batch, input_size)
    h_prev:  (1, batch, hidden)
    c_prev:  (1, batch, hidden)
    Returns (lstm_out, h_new, c_new), each (1, batch, hidden).
    """
    h_seq, h_f, c_f = lstm_seq(az[None, :, :], h_prev[0], c_prev[0],
                               wih_t, whh_t, bias)
    lstm_out = h_seq                      # (1, B, H): seq_len == 1 output
    return lstm_out, h_f[None], c_f[None]


# ----------------------------- references ----------------------------------

def _reference_seq(az_seq, h0, c0, w_ih, w_hh, b_ih, b_hh):
    """Pure-JAX (f32) reference of T chained PyTorch nn.LSTM steps."""
    H = h0.shape[-1]

    def step(carry, x):
        h, c = carry
        gates = x @ w_ih.T + b_ih + h @ w_hh.T + b_hh
        i_g = jax.nn.sigmoid(gates[:, 0 * H:1 * H])
        f_g = jax.nn.sigmoid(gates[:, 1 * H:2 * H])
        g_g = jnp.tanh(gates[:, 2 * H:3 * H])
        o_g = jax.nn.sigmoid(gates[:, 3 * H:4 * H])
        c_new = f_g * c + i_g * g_g
        h_new = o_g * jnp.tanh(c_new)
        return (h_new, c_new), h_new

    (h_f, c_f), h_seq = jax.lax.scan(step, (h0, c0), az_seq)
    return h_seq, h_f, c_f


if __name__ == "__main__":
    # Small shapes consistent with the module: one LSTM layer, one time step.
    batch_size = 4
    input_size = 16
    hidden_size = 32

    key = jax.random.PRNGKey(0)
    k_x, k_h, k_c, k_wi, k_wh, k_bi, k_bh, k_seq = jax.random.split(key, 8)

    # Deterministic parameter init matching PyTorch's U(-1/sqrt(H), 1/sqrt(H)).
    bound = 1.0 / math.sqrt(hidden_size)
    w_ih = jax.random.uniform(k_wi, (4 * hidden_size, input_size),
                              jnp.float32, -bound, bound)
    w_hh = jax.random.uniform(k_wh, (4 * hidden_size, hidden_size),
                              jnp.float32, -bound, bound)
    b_ih = jax.random.uniform(k_bi, (4 * hidden_size,), jnp.float32, -bound, bound)
    b_hh = jax.random.uniform(k_bh, (4 * hidden_size,), jnp.float32, -bound, bound)

    # One-time parameter preparation (reorder / pad / fuse / cast).
    wih_t, whh_t, bias = prepare_params(w_ih, w_hh, b_ih, b_hh)

    # reset(): h_prev / c_prev drawn from a standard normal.
    h_prev = jax.random.normal(k_h, (1, batch_size, hidden_size), jnp.float32)
    c_prev = jax.random.normal(k_c, (1, batch_size, hidden_size), jnp.float32)

    # --- Single-step forward (the module's exact semantics) -----------------
    az = jax.random.normal(k_x, (batch_size, input_size), jnp.float32)
    lstm_out, h_new, c_new = lstm_step(az, h_prev, c_prev, wih_t, whh_t, bias)
    jax.block_until_ready((lstm_out, h_new, c_new))

    h_ref_seq, h_ref, c_ref = _reference_seq(az[None], h_prev[0], c_prev[0],
                                             w_ih, w_hh, b_ih, b_hh)
    # bf16 recurrent matmul operand with f32 accumulation -> relaxed tolerance.
    assert jnp.allclose(lstm_out[0], h_ref, atol=2e-2, rtol=2e-2)
    assert jnp.allclose(h_new[0], h_ref, atol=2e-2, rtol=2e-2)
    assert jnp.allclose(c_new[0], c_ref, atol=2e-2, rtol=2e-2)

    # --- Multi-step (time loop internalized in one pallas_call) -------------
    T = 8
    az_seq = jax.random.normal(k_seq, (T, batch_size, input_size), jnp.float32)
    h_seq, h_f, c_f = lstm_seq(az_seq, h_prev[0], c_prev[0],
                               wih_t, whh_t, bias)
    jax.block_until_ready((h_seq, h_f, c_f))

    h_seq_ref, h_f_ref, c_f_ref = _reference_seq(az_seq, h_prev[0], c_prev[0],
                                                 w_ih, w_hh, b_ih, b_hh)
    assert jnp.allclose(h_seq, h_seq_ref, atol=5e-2, rtol=5e-2)
    assert jnp.allclose(h_f, h_f_ref, atol=5e-2, rtol=5e-2)
    assert jnp.allclose(c_f, c_f_ref, atol=5e-2, rtol=5e-2)

    print("KERNEL_OK")
</pallas_src>

<mosaic_0001>
module attributes {stable_mosaic.version = 11 : i64} {
  func.func @lstm_seq_kernel(%arg0: i32, %arg1: i32, %arg2: memref<1x8x512xf32, #tpu.memory_space<vmem>>, %arg3: memref<8x128xf32, #tpu.memory_space<vmem>>, %arg4: memref<8x128xf32, #tpu.memory_space<vmem>>, %arg5: memref<128x512xbf16, #tpu.memory_space<vmem>>, %arg6: memref<1x8x128xf32, #tpu.memory_space<vmem>>, %arg7: memref<8x128xf32, #tpu.memory_space<vmem>>, %arg8: memref<8x128xbf16, #tpu.memory_space<vmem>>, %arg9: memref<8x128xf32, #tpu.memory_space<vmem>>) attributes {dimension_semantics = [#tpu.dimension_semantics<parallel>, #tpu.dimension_semantics<arbitrary>], iteration_bounds = array<i64: 1, 1>, scalar_prefetch = 0 : i64, scratch_operands = 2 : i64, tpu.core_type = #tpu.core_type<tc>, window_params = [{transform_indices = @transform_0, window_bounds = array<i64: 1, 8, 512>}, {transform_indices = @transform_1, window_bounds = array<i64: 8, 128>}, {transform_indices = @transform_2, window_bounds = array<i64: 8, 128>}, {pipeline_mode = #tpu.pipeline_mode<synchronous>, transform_indices = @transform_3, window_bounds = array<i64: 128, 512>}, {transform_indices = @transform_4, window_bounds = array<i64: 1, 8, 128>}, {transform_indices = @transform_5, window_bounds = array<i64: 8, 128>}]} {
    %c0_i32 = arith.constant 0 : i32
    %0 = arith.cmpi eq, %arg1, %c0_i32 : i32
    %1 = arith.extui %0 : i1 to i32
    %c0_i32_0 = arith.constant 0 : i32
    %2 = arith.cmpi ne, %1, %c0_i32_0 : i32
    scf.if %2 {
      %c0_18 = arith.constant 0 : index
      %c0_19 = arith.constant 0 : index
      %37 = vector.load %arg3[%c0_18, %c0_19] : memref<8x128xf32, #tpu.memory_space<vmem>>, vector<8x128xf32>
      %38 = arith.truncf %37 : vector<8x128xf32> to vector<8x128xbf16>
      %c0_20 = arith.constant 0 : index
      %c0_21 = arith.constant 0 : index
      %39 = vector.load %arg8[%c0_20, %c0_21] : memref<8x128xbf16, #tpu.memory_space<vmem>>, vector<8x128xbf16>
      tpu.vector_store %arg8[%c0_20, %c0_21], %38 {strides = array<i32>} : memref<8x128xbf16, #tpu.memory_space<vmem>>, vector<8x128xbf16>,
      %c0_22 = arith.constant 0 : index
      %c0_23 = arith.constant 0 : index
      %40 = vector.load %arg4[%c0_22, %c0_23] : memref<8x128xf32, #tpu.memory_space<vmem>>, vector<8x128xf32>
      %c0_24 = arith.constant 0 : index
      %c0_25 = arith.constant 0 : index
      %41 = vector.load %arg9[%c0_24, %c0_25] : memref<8x128xf32, #tpu.memory_space<vmem>>, vector<8x128xf32>
      tpu.vector_store %arg9[%c0_24, %c0_25], %40 {strides = array<i32>} : memref<8x128xf32, #tpu.memory_space<vmem>>, vector<8x128xf32>,
    } else {
    }
    %c0_i32_1 = arith.constant 0 : i32
    %3 = arith.index_cast %c0_i32_1 : i32 to index
    %c0 = arith.constant 0 : index
    %c0_2 = arith.constant 0 : index
    %4 = vector.load %arg2[%3, %c0, %c0_2] : memref<1x8x512xf32, #tpu.memory_space<vmem>>, vector<1x8x512xf32>
    %5 = vector.shape_cast %4 : vector<1x8x512xf32> to vector<8x512xf32>
    %c0_3 = arith.constant 0 : index
    %c0_4 = arith.constant 0 : index
    %6 = vector.load %arg8[%c0_3, %c0_4] : memref<8x128xbf16, #tpu.memory_space<vmem>>, vector<8x128xbf16>
    %c0_5 = arith.constant 0 : index
    %c0_6 = arith.constant 0 : index
    %7 = vector.load %arg5[%c0_5, %c0_6] : memref<128x512xbf16, #tpu.memory_space<vmem>>, vector<128x512xbf16>
    %cst = arith.constant dense<0.000000e+00> : vector<8x512xf32>
    %8 = tpu.matmul %6, %7, %cst {dimension_numbers = #tpu.dot_dimension_numbers<[1], [0], [0], [1], [0, 0, 1, 1], [], []>} : vector<8x128xbf16>, vector<128x512xbf16>, vector<8x512xf32> -> vector<8x512xf32>
    %9 = arith.addf %5, %8 : vector<8x512xf32>
    %10 = vector.extract_strided_slice %9 {offsets = [0, 0], sizes = [8, 384], strides = [1, 1]} : vector<8x512xf32> to vector<8x384xf32>
    %11 = arith.negf %10 : vector<8x384xf32>
    %12 = math.exp %11 : vector<8x384xf32>
    %cst_7 = arith.constant 1.000000e+00 : f32
    %13 = vector.broadcast %cst_7 : f32 to vector<8x384xf32>
    %14 = arith.addf %13, %12 : vector<8x384xf32>
    %15 = arith.divf %13, %14 : vector<8x384xf32>
    %16 = vector.extract_strided_slice %15 {offsets = [0, 0], sizes = [8, 128], strides = [1, 1]} : vector<8x384xf32> to vector<8x128xf32>
    %17 = vector.extract_strided_slice %15 {offsets = [0, 128], sizes = [8, 128], strides = [1, 1]} : vector<8x384xf32> to vector<8x128xf32>
    %18 = vector.extract_strided_slice %15 {offsets = [0, 256], sizes = [8, 128], strides = [1, 1]} : vector<8x384xf32> to vector<8x128xf32>
    %19 = vector.extract_strided_slice %9 {offsets = [0, 384], sizes = [8, 128], strides = [1, 1]} : vector<8x512xf32> to vector<8x128xf32>
    %20 = math.tanh %19 : vector<8x128xf32>
    %c0_8 = arith.constant 0 : index
    %c0_9 = arith.constant 0 : index
    %21 = vector.load %arg9[%c0_8, %c0_9] : memref<8x128xf32, #tpu.memory_space<vmem>>, vector<8x128xf32>
    %22 = arith.mulf %17, %21 : vector<8x128xf32>
    %23 = arith.mulf %16, %20 : vector<8x128xf32>
    %24 = arith.addf %22, %23 : vector<8x128xf32>
    %25 = math.tanh %24 : vector<8x128xf32>
    %26 = arith.mulf %18, %25 : vector<8x128xf32>
    %c0_10 = arith.constant 0 : index
    %c0_11 = arith.constant 0 : index
    %27 = vector.load %arg9[%c0_10, %c0_11] : memref<8x128xf32, #tpu.memory_space<vmem>>, vector<8x128xf32>
    tpu.vector_store %arg9[%c0_10, %c0_11], %24 {strides = array<i32>} : memref<8x128xf32, #tpu.memory_space<vmem>>, vector<8x128xf32>,
    %28 = arith.truncf %26 : vector<8x128xf32> to vector<8x128xbf16>
    %c0_12 = arith.constant 0 : index
    %c0_13 = arith.constant 0 : index
    %29 = vector.load %arg8[%c0_12, %c0_13] : memref<8x128xbf16, #tpu.memory_space<vmem>>, vector<8x128xbf16>
    tpu.vector_store %arg8[%c0_12, %c0_13], %28 {strides = array<i32>} : memref<8x128xbf16, #tpu.memory_space<vmem>>, vector<8x128xbf16>,
    %30 = arith.index_cast %c0_i32_1 : i32 to index
    %c0_14 = arith.constant 0 : index
    %c0_15 = arith.constant 0 : index
    %31 = vector.load %arg6[%30, %c0_14, %c0_15] : memref<1x8x128xf32, #tpu.memory_space<vmem>>, vector<1x8x128xf32>
    %32 = vector.shape_cast %31 : vector<1x8x128xf32> to vector<8x128xf32>
    %33 = vector.shape_cast %26 : vector<8x128xf32> to vector<1x8x128xf32>
    tpu.vector_store %arg6[%30, %c0_14, %c0_15], %33 {strides = array<i32>} : memref<1x8x128xf32, #tpu.memory_space<vmem>>, vector<1x8x128xf32>,
    %c1_i32 = arith.constant 1 : i32
    %c0_i32_16 = arith.constant 0 : i32
    %34 = arith.cmpi eq, %arg1, %c0_i32_16 : i32
    %35 = arith.extui %34 : i1 to i32
    %c0_i32_17 = arith.constant 0 : i32
    %36 = arith.cmpi ne, %35, %c0_i32_17 : i32
    scf.if %36 {
      %c0_18 = arith.constant 0 : index
      %c0_19 = arith.constant 0 : index
      %37 = vector.load %arg9[%c0_18, %c0_19] : memref<8x128xf32, #tpu.memory_space<vmem>>, vector<8x128xf32>
      %c0_20 = arith.constant 0 : index
      %c0_21 = arith.constant 0 : index
      %38 = vector.load %arg7[%c0_20, %c0_21] : memref<8x128xf32, #tpu.memory_space<vmem>>, vector<8x128xf32>
      tpu.vector_store %arg7[%c0_20, %c0_21], %37 {strides = array<i32>} : memref<8x128xf32, #tpu.memory_space<vmem>>, vector<8x128xf32>,
    } else {
    }
    return
  }
  func.func @transform_0(%arg0: i32, %arg1: i32) -> (i32, i32, i32) {
    %c0_i32 = arith.constant 0 : i32
    %c0_i32_0 = arith.constant 0 : i32
    return %arg1, %arg0, %c0_i32 : i32, i32, i32
  }
  func.func @transform_1(%arg0: i32, %arg1: i32) -> (i32, i32) {
    %c0_i32 = arith.constant 0 : i32
    %c0_i32_0 = arith.constant 0 : i32
    return %arg0, %c0_i32 : i32, i32
  }
  func.func @transform_2(%arg0: i32, %arg1: i32) -> (i32, i32) {
    %c0_i32 = arith.constant 0 : i32
    %c0_i32_0 = arith.constant 0 : i32
    return %arg0, %c0_i32 : i32, i32
  }
  func.func @transform_3(%arg0: i32, %arg1: i32) -> (i32, i32) {
    %c0_i32 = arith.constant 0 : i32
    %c0_i32_0 = arith.constant 0 : i32
    %c0_i32_1 = arith.constant 0 : i32
    return %c0_i32, %c0_i32_0 : i32, i32
  }
  func.func @transform_4(%arg0: i32, %arg1: i32) -> (i32, i32, i32) {
    %c0_i32 = arith.constant 0 : i32
    %c0_i32_0 = arith.constant 0 : i32
    return %arg1, %arg0, %c0_i32 : i32, i32, i32
  }
  func.func @transform_5(%arg0: i32, %arg1: i32) -> (i32, i32) {
    %c0_i32 = arith.constant 0 : i32
    %c0_i32_0 = arith.constant 0 : i32
    return %arg0, %c0_i32 : i32, i32
  }
}

</mosaic_0001>

<llo_original>
// kernel: lstm_seq.1
$region0: #{lstm_seq.1}
  #allocation0 [shape = 'u32[]', space=smem, size = 0x4, offset = 0x4, fixed_abs, tag = 'smem constant byte address 0x4 - core index']
  #allocation1 [shape = 'u32[144,128]{1,0:T(1,128)}', space=vmem, size = 0x12000, scoped, tag = 'internal scratch']
  #allocation2 [shape = 'bf16[8,128]{1,0:T(8,128)(2,1)}', space=vmem, size = 0x800, scoped, tag = 'scratch operand']
  #allocation3 [shape = 'f32[8,128]{1,0:T(8,128)}', space=vmem, size = 0x1000, scoped, tag = 'scratch operand']
  %s0 = inlined_call_operand.vmem [shape: f32[1,8,512], index: 0, kind: input, shape index: {}]
  %s1 = inlined_call_operand.vmem [shape: f32[8,128], index: 1, kind: input, shape index: {}]
  %s2 = inlined_call_operand.vmem [shape: f32[8,128], index: 2, kind: input, shape index: {}]
  %s3 = inlined_call_operand.hbm [shape: bf16[128,512], index: 3, kind: input, shape index: {}]
  %s4 = inlined_call_operand.vmem [shape: f32[1,8,128], index: 4, kind: output, shape index: {0}]
  %s5 = inlined_call_operand.vmem [shape: f32[8,128], index: 5, kind: output, shape index: {1}]
  %6 = xla_tuple %s4, %s5
  %s7 = sld [smem:[#allocation0]]
  $region46: #{lstm_seq.1} parent=0
    _
  %s9 = ssub.s32 1, %s7
  %s10 = scalar_select 0, %s9, %s7
  $region1: #{lstm_seq.1} parent=0
    #allocation4 [shape = 'u8[131072]{0}', space=vmem, size = 0x20000, scoped, tag = 'input window, operand 3, single buffered']
    #allocation5 [shape = 's32[1]{0}', space=sflag, size = 0x4, scoped, tag = 'scoped memory for lstm_seq.1']
    %11 = vsyncpa [#allocation5], 0
    // Predicated region
    $region2: #{lstm_seq.1} parent=1 // pred_check
      _
    $region3: #{lstm_seq.1} parent=1 // pred_check_branch
      %13 = sbr.rel (0) target = $region5
    $region4: #{lstm_seq.1} parent=1 // pred_region
      _
    $region5: #{lstm_seq.1} parent=1 // pred_fallthru
      _
    // Predicated region
    $region6: #{lstm_seq.1} parent=1 // pred_check
      _
    $region7: #{lstm_seq.1} parent=1 // pred_check_branch
      %15 = sbr.rel (0) target = $region9
    $region8: #{lstm_seq.1} parent=1 // pred_region
      _
    $region9: #{lstm_seq.1} parent=1 // pred_fallthru
      _
    // Predicated region
    $region10: #{lstm_seq.1} parent=1 // pred_check
      _
    $region11: #{lstm_seq.1} parent=1 // pred_check_branch
      %17 = sbr.rel (0) target = $region13
    $region12: #{lstm_seq.1} parent=1 // pred_region
      _
    $region13: #{lstm_seq.1} parent=1 // pred_fallthru
      _
    // Predicated region
    $region14: #{lstm_seq.1} parent=1 // pred_check
      _
    $region15: #{lstm_seq.1} parent=1 // pred_check_branch
      %19 = sbr.rel (0) target = $region17
    $region16: #{lstm_seq.1} parent=1 // pred_region
      %s21 = ssub.s32 4096, 4096
      %22 = vsyncadd [#allocation5], %s21
      %s23 = sshll.u32 [#allocation4], 4
      %s24 = int_to_ptr.vmem [resolvable:$true] %s23
      %29 = dma.hbm_to_vmem [thread:$0]  %s3, 4096, %s24, [#allocation5], 256, 256, 16
    $region17: #{lstm_seq.1} parent=1 // pred_fallthru
      _
    // Predicated region
    $region18: #{lstm_seq.1} parent=1 // pred_check
      _
    $region19: #{lstm_seq.1} parent=1 // pred_check_branch
      %31 = sbr.rel (0) target = $region21
    $region20: #{lstm_seq.1} parent=1 // pred_region
      %32 = dma.done [#allocation5], 4096
    $region21: #{lstm_seq.1} parent=1 // pred_fallthru
      _
    %p34 = scmp.eq.s32.totalorder 0, 0
    // Predicated region
    $region22: #{lstm_seq.1} parent=1 // pred_check
      %p35 = pneg %p34
    $region23: #{lstm_seq.1} parent=1 // pred_check_branch
      %37 = sbr.rel (%p35) target = $region25
    $region24: #{lstm_seq.1} parent=1 // pred_region
      %v38 = vld [vmem:[%s1] sm:$0xff]
      %v39 = vpack.c.bf16 %v38, %v38
      %40 = vst [vmem:[#allocation2] sm:$0xf] %v39
      %v41 = vld [vmem:[%s2] sm:$0xff]
      %42 = vst [vmem:[#allocation3] sm:$0xff] %v41
    $region25: #{lstm_seq.1} parent=1 // pred_fallthru
      _
    %v43 = vld [vmem:[%s0] sm:$0xff]
    %v44 = vld [vmem:[%s0 + $0x8] sm:$0xff]
    %v45 = vld [vmem:[%s0 + $0x10] sm:$0xff]
    %v46 = vld [vmem:[%s0 + $0x18] sm:$0xff]
    %v47 = vld [vmem:[#allocation2] sm:$0xf]
    %v48 = vld [vmem:[#allocation4] sm:$0xff]
    %v49 = vld [vmem:[#allocation4 + $0x8] sm:$0xff]
    %v50 = vld [vmem:[#allocation4 + $0x10] sm:$0xff]
    %v51 = vld [vmem:[#allocation4 + $0x18] sm:$0xff]
    %v52 = vld [vmem:[#allocation4 + $0x20] sm:$0xff]
    %v53 = vld [vmem:[#allocation4 + $0x28] sm:$0xff]
    %v54 = vld [vmem:[#allocation4 + $0x30] sm:$0xff]
    %v55 = vld [vmem:[#allocation4 + $0x38] sm:$0xff]
    %v56 = vld [vmem:[#allocation4 + $0x40] sm:$0xff]
    %v57 = vld [vmem:[#allocation4 + $0x48] sm:$0xff]
    %v58 = vld [vmem:[#allocation4 + $0x50] sm:$0xff]
    %v59 = vld [vmem:[#allocation4 + $0x58] sm:$0xff]
    %v60 = vld [vmem:[#allocation4 + $0x60] sm:$0xff]
    %v61 = vld [vmem:[#allocation4 + $0x68] sm:$0xff]
    %v62 = vld [vmem:[#allocation4 + $0x70] sm:$0xff]
    %v63 = vld [vmem:[#allocation4 + $0x78] sm:$0xff]
    %v64 = vld [vmem:[#allocation4 + $0x80] sm:$0xff]
    %v65 = vld [vmem:[#allocation4 + $0x88] sm:$0xff]
    %v66 = vld [vmem:[#allocation4 + $0x90] sm:$0xff]
    %v67 = vld [vmem:[#allocation4 + $0x98] sm:$0xff]
    %v68 = vld [vmem:[#allocation4 + $0xa0] sm:$0xff]
    %v69 = vld [vmem:[#allocation4 + $0xa8] sm:$0xff]
    %v70 = vld [vmem:[#allocation4 + $0xb0] sm:$0xff]
    %v71 = vld [vmem:[#allocation4 + $0xb8] sm:$0xff]
    %v72 = vld [vmem:[#allocation4 + $0xc0] sm:$0xff]
    %v73 = vld [vmem:[#allocation4 + $0xc8] sm:$0xff]
    %v74 = vld [vmem:[#allocation4 + $0xd0] sm:$0xff]
    %v75 = vld [vmem:[#allocation4 + $0xd8] sm:$0xff]
    %v76 = vld [vmem:[#allocation4 + $0xe0] sm:$0xff]
    %v77 = vld [vmem:[#allocation4 + $0xe8] sm:$0xff]
    %v78 = vld [vmem:[#allocation4 + $0xf0] sm:$0xff]
    %v79 = vld [vmem:[#allocation4 + $0xf8] sm:$0xff]
    %v112 = vunpack.c.l.b16 %v48
    %v113 = vunpack.c.h.b16 %v48
    %v114 = vunpack.c.l.b16 %v49
    %v115 = vunpack.c.h.b16 %v49
    %v116 = vunpack.c.l.b16 %v50
    %v117 = vunpack.c.h.b16 %v50
    %v118 = vunpack.c.l.b16 %v51
    %v119 = vunpack.c.h.b16 %v51
    %v120 = vunpack.c.l.b16 %v52
    %v121 = vunpack.c.h.b16 %v52
    %v122 = vunpack.c.l.b16 %v53
    %v123 = vunpack.c.h.b16 %v53
    %v124 = vunpack.c.l.b16 %v54
    %v125 = vunpack.c.h.b16 %v54
    %v126 = vunpack.c.l.b16 %v55
    %v127 = vunpack.c.h.b16 %v55
    %v128 = vunpack.c.l.b16 %v56
    %v129 = vunpack.c.h.b16 %v56
    %v130 = vunpack.c.l.b16 %v57
    %v131 = vunpack.c.h.b16 %v57
    %v132 = vunpack.c.l.b16 %v58
    %v133 = vunpack.c.h.b16 %v58
    %v134 = vunpack.c.l.b16 %v59
    %v135 = vunpack.c.h.b16 %v59
    %v136 = vunpack.c.l.b16 %v60
    %v137 = vunpack.c.h.b16 %v60
    %v138 = vunpack.c.l.b16 %v61
    %v139 = vunpack.c.h.b16 %v61
    %v140 = vunpack.c.l.b16 %v62
    %v141 = vunpack.c.h.b16 %v62
    %v142 = vunpack.c.l.b16 %v63
    %v143 = vunpack.c.h.b16 %v63
    %v144 = vunpack.c.l.b16 %v64
    %v145 = vunpack.c.h.b16 %v64
    %v146 = vunpack.c.l.b16 %v65
    %v147 = vunpack.c.h.b16 %v65
    %v148 = vunpack.c.l.b16 %v66
    %v149 = vunpack.c.h.b16 %v66
    %v150 = vunpack.c.l.b16 %v67
    %v151 = vunpack.c.h.b16 %v67
    %v152 = vunpack.c.l.b16 %v68
    %v153 = vunpack.c.h.b16 %v68
    %v154 = vunpack.c.l.b16 %v69
    %v155 = vunpack.c.h.b16 %v69
    %v156 = vunpack.c.l.b16 %v70
    %v157 = vunpack.c.h.b16 %v70
    %v158 = vunpack.c.l.b16 %v71
    %v159 = vunpack.c.h.b16 %v71
    %v160 = vunpack.c.l.b16 %v72
    %v161 = vunpack.c.h.b16 %v72
    %v162 = vunpack.c.l.b16 %v73
    %v163 = vunpack.c.h.b16 %v73
    %v164 = vunpack.c.l.b16 %v74
    %v165 = vunpack.c.h.b16 %v74
    %v166 = vunpack.c.l.b16 %v75
    %v167 = vunpack.c.h.b16 %v75
    %v168 = vunpack.c.l.b16 %v76
    %v169 = vunpack.c.h.b16 %v76
    %v170 = vunpack.c.l.b16 %v77
    %v171 = vunpack.c.h.b16 %v77
    %v172 = vunpack.c.l.b16 %v78
    %v173 = vunpack.c.h.b16 %v78
    %v174 = vunpack.c.l.b16 %v79
    %v175 = vunpack.c.h.b16 %v79
    %v176 = vpack.c.b16 %v116, %v112
    %v177 = vpack.c.b16 %v117, %v113
    %v178 = vpack.c.b16 %v118, %v114
    %v179 = vpack.c.b16 %v119, %v115
    %v180 = vpack.c.b16 %v124, %v120
    %v181 = vpack.c.b16 %v125, %v121
    %v182 = vpack.c.b16 %v126, %v122
    %v183 = vpack.c.b16 %v127, %v123
    %v184 = vpack.c.b16 %v132, %v128
    %v185 = vpack.c.b16 %v133, %v129
    %v186 = vpack.c.b16 %v134, %v130
    %v187 = vpack.c.b16 %v135, %v131
    %v188 = vpack.c.b16 %v140, %v136
    %v189 = vpack.c.b16 %v141, %v137
    %v190 = vpack.c.b16 %v142, %v138
    %v191 = vpack.c.b16 %v143, %v139
    %v192 = vpack.c.b16 %v148, %v144
    %v193 = vpack.c.b16 %v149, %v145
    %v194 = vpack.c.b16 %v150, %v146
    %v195 = vpack.c.b16 %v151, %v147
    %v196 = vpack.c.b16 %v156, %v152
    %v197 = vpack.c.b16 %v157, %v153
    %v198 = vpack.c.b16 %v158, %v154
    %v199 = vpack.c.b16 %v159, %v155
    %v200 = vpack.c.b16 %v164, %v160
    %v201 = vpack.c.b16 %v165, %v161
    %v202 = vpack.c.b16 %v166, %v162
    %v203 = vpack.c.b16 %v167, %v163
    %v204 = vpack.c.b16 %v172, %v168
    %v205 = vpack.c.b16 %v173, %v169
    %v206 = vpack.c.b16 %v174, %v170
    %v207 = vpack.c.b16 %v175, %v171
    %240 = vmatprep.subr.bf16.mxu0 %v205
    %241 = vmatpush1.bf16.msra.mxu0 %v204
    %242 = vmatprep.subr.bf16.mxu0 %v201
    %243 = vmatpush1.bf16.msra.mxu0 %v200
    %244 = vmatprep.subr.bf16.mxu0 %v197
    %245 = vmatpush1.bf16.msra.mxu0 %v196
    %246 = vmatprep.subr.bf16.mxu0 %v193
    %247 = vmatpush1.bf16.msra.mxu0 %v192
    %248 = vmatprep.subr.bf16.mxu0 %v189
    %249 = vmatpush1.bf16.msra.mxu0 %v188
    %250 = vmatprep.subr.bf16.mxu0 %v185
    %251 = vmatpush1.bf16.msra.mxu0 %v184
    %252 = vmatprep.subr.bf16.mxu0 %v181
    %253 = vmatpush1.bf16.msra.mxu0 %v180
    %254 = vmatprep.subr.bf16.mxu0 %v177
    %255 = vmatpush1.bf16.msra.mxu0 %v176
    %256 = vmatprep.subr.bf16.mxu0 0
    %257 = vmatpush2.bf16.msra.mxu0 0
    %258 = vmatprep.subr.bf16.mxu0 0
    %259 = vmatpush2.bf16.msra.mxu0 0
    %260 = vmatprep.subr.bf16.mxu0 0
    %261 = vmatpush2.bf16.msra.mxu0 0
    %262 = vmatprep.subr.bf16.mxu0 0
    %263 = vmatpush2.bf16.msra.mxu0 0
    %264 = vmatprep.subr.bf16.mxu0 0
    %265 = vmatpush2.bf16.msra.mxu0 0
    %266 = vmatprep.subr.bf16.mxu0 0
    %267 = vmatpush2.bf16.msra.mxu0 0
    %268 = vmatprep.subr.bf16.mxu0 0
    %269 = vmatpush2.bf16.msra.mxu0 0
    %270 = vmatprep.subr.bf16.mxu0 0
    %271 = vmatpush2.bf16.msra.mxu0 0
    %272 = vmatprep.mubr.bf16.mxu0 0
    %273 = vmatmul.mubr.bf16.gmra.mxu0 %v47
    %v274 = vpop.f32.mrf.mxu0
    %v275 = vadd.f32 0.0, %v274
    %v276 = vpop.f32.mrf.mxu0
    %v277 = vadd.f32 0.0, %v276
    %v278 = vpop.f32.mrf.mxu0
    %v279 = vpop.f32.mrf.mxu0
    %280 = vdwg.mxu0
    %281 = vmatprep.subr.bf16.mxu0 %v207
    %282 = vmatpush1.bf16.msra.mxu0 %v206
    %283 = vmatprep.subr.bf16.mxu0 %v203
    %284 = vmatpush1.bf16.msra.mxu0 %v202
    %285 = vmatprep.subr.bf16.mxu0 %v199
    %286 = vmatpush1.bf16.msra.mxu0 %v198
    %287 = vmatprep.subr.bf16.mxu0 %v195
    %288 = vmatpush1.bf16.msra.mxu0 %v194
    %289 = vmatprep.subr.bf16.mxu0 %v191
    %290 = vmatpush1.bf16.msra.mxu0 %v190
    %291 = vmatprep.subr.bf16.mxu0 %v187
    %292 = vmatpush1.bf16.msra.mxu0 %v186
    %293 = vmatprep.subr.bf16.mxu0 %v183
    %294 = vmatpush1.bf16.msra.mxu0 %v182
    %295 = vmatprep.subr.bf16.mxu0 %v179
    %296 = vmatpush1.bf16.msra.mxu0 %v178
    %297 = vmatprep.subr.bf16.mxu0 0
    %298 = vmatpush2.bf16.msra.mxu0 0
    %299 = vmatprep.subr.bf16.mxu0 0
    %300 = vmatpush2.bf16.msra.mxu0 0
    %301 = vmatprep.subr.bf16.mxu0 0
    %302 = vmatpush2.bf16.msra.mxu0 0
    %303 = vmatprep.subr.bf16.mxu0 0
    %304 = vmatpush2.bf16.msra.mxu0 0
    %305 = vmatprep.subr.bf16.mxu0 0
    %306 = vmatpush2.bf16.msra.mxu0 0
    %307 = vmatprep.subr.bf16.mxu0 0
    %308 = vmatpush2.bf16.msra.mxu0 0
    %309 = vmatprep.subr.bf16.mxu0 0
    %310 = vmatpush2.bf16.msra.mxu0 0
    %311 = vmatprep.subr.bf16.mxu0 0
    %312 = vmatpush2.bf16.msra.mxu0 0
    %313 = vmatprep.mubr.bf16.mxu0 0
    %314 = vmatmul.mubr.bf16.gmra.mxu0 %v47
    %v315 = vpop.f32.mrf.mxu0
    %v316 = vadd.f32 0.0, %v315
    %v317 = vpop.f32.mrf.mxu0
    %v318 = vadd.f32 0.0, %v317
    %v319 = vpop.f32.mrf.mxu0
    %v320 = vpop.f32.mrf.mxu0
    %321 = vdwg.mxu0
    %v322 = vadd.f32 %v43, %v275
    %v323 = vadd.f32 %v44, %v277
    %v324 = vadd.f32 %v45, %v316
    %v325 = vadd.f32 %v46, %v318
    %v326 = vxor.u32 %v322, 2147483648
    %v327 = vxor.u32 %v323, 2147483648
    %v328 = vxor.u32 %v324, 2147483648
    %v329 = vmul.f32 %v326, 1.442695
    %v330 = vpow.pop %v329
    %v331 = vmul.f32 %v327, 1.442695
    %v332 = vpow.pop %v331
    %v333 = vmul.f32 %v328, 1.442695
    %v334 = vpow.pop %v333
    %v335 = vadd.f32 %v330, 1.0
    %v336 = vadd.f32 %v332, 1.0
    %v337 = vadd.f32 %v334, 1.0
    %v338 = vrcp.pop %v335
    %v339 = vmul.f32 1.0, %v338
    %v340 = vrcp.pop %v336
    %v341 = vmul.f32 1.0, %v340
    %v342 = vrcp.pop %v337
    %v343 = vmul.f32 1.0, %v342
    %v344 = vtanh.pop %v325
    %v345 = vld [vmem:[#allocation3] sm:$0xff]
    %v346 = vmul.f32 %v341, %v345
    %v347 = vmul.f32 %v339, %v344
    %v348 = vadd.f32 %v346, %v347
    %v349 = vtanh.pop %v348
    %v350 = vmul.f32 %v343, %v349
    %351 = vst [vmem:[#allocation3] sm:$0xff] %v348
    %v352 = vpack.c.bf16 %v350, %v350
    %353 = vst [vmem:[#allocation2] sm:$0xf] %v352
    %354 = vst [vmem:[%s4] sm:$0xff] %v350
    // Predicated region
    $region26: #{lstm_seq.1} parent=1 // pred_check
      %p355 = pneg %p34
    $region27: #{lstm_seq.1} parent=1 // pred_check_branch
      %357 = sbr.rel (%p355) target = $region29
    $region28: #{lstm_seq.1} parent=1 // pred_region
      %v358 = vld [vmem:[#allocation3] sm:$0xff]
      %359 = vst [vmem:[%s5] sm:$0xff] %v358
    $region29: #{lstm_seq.1} parent=1 // pred_fallthru
      _
    // Predicated region
    $region30: #{lstm_seq.1} parent=1 // pred_check
      _
    $region31: #{lstm_seq.1} parent=1 // pred_check_branch
      %361 = sbr.rel (0) target = $region33
    $region32: #{lstm_seq.1} parent=1 // pred_region
      _
    $region33: #{lstm_seq.1} parent=1 // pred_fallthru
      _
    // Predicated region
    $region34: #{lstm_seq.1} parent=1 // pred_check
      _
    $region35: #{lstm_seq.1} parent=1 // pred_check_branch
      %363 = sbr.rel (0) target = $region37
    $region36: #{lstm_seq.1} parent=1 // pred_region
      _
    $region37: #{lstm_seq.1} parent=1 // pred_fallthru
      _
    // Predicated region
    $region38: #{lstm_seq.1} parent=1 // pred_check
      _
    $region39: #{lstm_seq.1} parent=1 // pred_check_branch
      %365 = sbr.rel (0) target = $region41
    $region40: #{lstm_seq.1} parent=1 // pred_region
      _
    $region41: #{lstm_seq.1} parent=1 // pred_fallthru
      _
    // Predicated region
    $region42: #{lstm_seq.1} parent=1 // pred_check
      _
    $region43: #{lstm_seq.1} parent=1 // pred_check_branch
      %367 = sbr.rel (0) target = $region45
    $region44: #{lstm_seq.1} parent=1 // pred_region
      _
    $region45: #{lstm_seq.1} parent=1 // pred_fallthru
      _
    %368 = vsyncpa [#allocation5], 1

</llo_original>
